<compile_context>
chip_gen: v7x
topology: tpu7x:2x2x1
jax: 0.10.0
libtpu: 0.0.40
codegen_flags: <defaults>
</compile_context>

<pallas_src>
from functools import partial

import jax
import jax.numpy as jnp
import numpy as np
from jax.experimental import pallas as pl
from jax.experimental.pallas import tpu as pltpu


def _pick_block_params(n, c, s, in_itemsize):
    """Pick the batch-block size bn and the scoped-VMEM limit (generation aware)."""
    try:
        vmem_cap = int(pltpu.get_tpu_info().vmem_capacity_bytes)
    except Exception:                       # unknown part / non-TPU trace
        vmem_cap = 64 << 20                 # conservative (v7x-sized) fallback
    if vmem_cap >= (96 << 20):              # v5e / v6e: 128 MiB physical VMEM
        target_block = 6 << 20
        vmem_limit = 64 << 20
    else:                                   # v7x: 64 MiB per TensorCore
        target_block = 3 << 20
        vmem_limit = 48 << 20

    # HBM bytes streamed per sample (per input), and VMEM bytes per sample:
    # 2 inputs x 2 pipeline buffers in the input dtype + ~3 block-sized f32
    # temporaries (x = l+g, the e*l product, slack) + the double-buffered c.
    per_sample_hbm = max(1, c * s * in_itemsize)
    per_sample_vmem = c * s * (4 * in_itemsize + 3 * 4) + 2 * s * in_itemsize

    if n <= 8:
        bn = n                                   # one full-batch block
    else:
        bn = target_block // per_sample_hbm
        bn = min(bn, (vmem_limit - (4 << 20)) // max(per_sample_vmem, 1))
        bn = min(bn, n // 2)                     # >=2 grid steps (v7x megacore)
        bn = max(8, (bn // 8) * 8)               # 8-sublane-aligned output blocks
        bn = min(bn, (n // 8) * 8)
    # If even the minimum block overshoots the scoped limit (very large C*S),
    # raise the limit toward physical VMEM rather than failing to compile.
    # (Truly huge C*S would want a two-pass softmax split over S -- not needed
    # for the shapes this module is used with.)
    need = bn * per_sample_vmem + (4 << 20)
    if need > vmem_limit:
        vmem_limit = max(vmem_limit, min(int(vmem_cap * 0.9), int(need)))
    return int(bn), int(vmem_limit)


def _linear_attn_kernel(w_ref, l_ref, g_ref, c_ref, gout_ref, *,
                        normalize_attn, inv_s):
    # Blocks: w_ref (C, 1) f32; l_ref/g_ref (bn, C, S); c_ref (bn, S);
    # gout_ref (bn, C).  S is the full spatial extent on the lane axis; Mosaic
    # masks the ragged lanes in every reduction below, so no explicit iota<S
    # mask is needed even when S is not a multiple of 128.
    l = l_ref[...]
    # f32 accumulation path.  (For f32 inputs these casts are no-ops; for bf16
    # streams on v7x one could keep the multiplies in bf16 / push the channel
    # contraction onto the MXU -- not needed for the f32 demo.)
    x = (l + g_ref[...]).astype(jnp.float32)              # (bn, C, S)
    w = w_ref[...]                                         # (C, 1) f32

    # 1x1 conv over channels: VPU broadcast-multiply + sublane (channel)
    # reduce -- no degenerate M=1 MXU matvec per grid step.
    c = jnp.sum(x * w[None, :, :], axis=1)                 # (bn, S) f32

    # Pre-softmax logits are a module output -- lane-dense store.
    c_ref[...] = c.astype(c_ref.dtype)

    lf = l.astype(jnp.float32)                             # no-op for f32 inputs
    if normalize_attn:
        # softmax fused with the pooling:
        #   g_out = sum_s softmax(c)_s * l_s = (sum_s e_s * l_s) / (sum_s e_s)
        m = jnp.max(c, axis=-1, keepdims=True)             # (bn, 1)
        e = jnp.exp(c - m)                                  # (bn, S)
        den = jnp.sum(e, axis=-1, keepdims=True)           # (bn, 1)
        num = jnp.sum(e[:, None, :] * lf, axis=-1)         # (bn, C) lane-reduce
        # One reciprocal per sample on the EUP slot; a single Newton step
        # restores full f32 accuracy at negligible (bn-scalar) cost.
        r = pl.reciprocal(den, approx=True)
        r = r * (2.0 - den * r)
        g_out = num * r
    else:
        # sigmoid gate + adaptive_avg_pool2d(., (1,1)) == mean over spatial.
        a = jax.nn.sigmoid(c)                               # (bn, S)
        g_out = jnp.sum(a[:, None, :] * lf, axis=-1) * inv_s

    gout_ref[...] = g_out.astype(gout_ref.dtype)            # (bn, C) slab store


def linear_attention_block(l, g, weight, *, normalize_attn=True):
    """l, g: (N, C, W, H); weight: (1, C, 1, 1) == Conv2d(C->1, k=1, bias=False).

    Returns (c, g_out): c (N, 1, W, H) pre-softmax logits, g_out (N, C) pooled
    features, matching the PyTorch module's forward.
    """
    N, C, W, H = l.shape
    S = W * H

    # Flatten spatial into a single lane-dense axis.  No jnp.pad of l or g:
    # the BlockSpecs below use the full C and full S extents, so there is no
    # extra HBM round trip for padding.
    l3 = l.reshape(N, C, S)
    g3 = g.reshape(N, C, S)
    w2 = weight.reshape(C, 1).astype(jnp.float32)

    bn, vmem_limit = _pick_block_params(N, C, S, jnp.dtype(l.dtype).itemsize)

    kernel = partial(_linear_attn_kernel,
                     normalize_attn=normalize_attn, inv_s=1.0 / S)

    c_out, g_out = pl.pallas_call(
        kernel,
        out_shape=(
            jax.ShapeDtypeStruct((N, S), l.dtype),    # pre-softmax logits c
            jax.ShapeDtypeStruct((N, C), l.dtype),    # pooled features g_out
        ),
        grid_spec=pltpu.PrefetchScalarGridSpec(
            num_scalar_prefetch=0,
            # Ragged final batch block is fine: per-row math only, and Pallas
            # drops the out-of-bounds rows on the output writes.
            grid=(pl.cdiv(N, bn),),
            in_specs=[
                pl.BlockSpec((C, 1), lambda n: (0, 0)),           # weight (resident)
                pl.BlockSpec((bn, C, S), lambda n: (n, 0, 0)),    # l block
                pl.BlockSpec((bn, C, S), lambda n: (n, 0, 0)),    # g block
            ],
            out_specs=[
                pl.BlockSpec((bn, S), lambda n: (n, 0)),          # c (lane-dense)
                pl.BlockSpec((bn, C), lambda n: (n, 0)),          # g_out slab
            ],
        ),
        compiler_params=pltpu.CompilerParams(
            dimension_semantics=("parallel",),
            vmem_limit_bytes=vmem_limit),
    )(w2, l3, g3)

    return c_out.reshape(N, 1, W, H), g_out


def _reference(l, g, weight, *, normalize_attn=True):
    """Plain-JAX reference matching the PyTorch forward."""
    N, C, W, H = l.shape
    x = (l + g).reshape(N, C, -1)                            # (N, C, S)
    w = weight.reshape(1, C)
    c = jnp.einsum('oc,ncs->nos', w, x)                      # (N, 1, S)
    if normalize_attn:
        a = jax.nn.softmax(c, axis=2)
        g_out = jnp.sum(a * l.reshape(N, C, -1), axis=2)     # (N, C)
    else:
        a = jax.nn.sigmoid(c)
        g_out = jnp.mean(a * l.reshape(N, C, -1), axis=2)
    return c.reshape(N, 1, W, H), g_out


def _check(out, ref, rtol=1e-5, atol=1e-5):
    np.testing.assert_allclose(np.asarray(out), np.asarray(ref), rtol=rtol, atol=atol)


if __name__ == "__main__":
    key = jax.random.PRNGKey(0)
    k_l, k_g, k_w = jax.random.split(key, 3)

    fwd = jax.jit(linear_attention_block, static_argnames=("normalize_attn",))

    # Small shapes consistent with the module: batch=2, channels=4, 16x16 map.
    N, C, W, H = 2, 4, 16, 16
    l = jax.random.normal(k_l, (N, C, W, H), dtype=jnp.float32)
    g = jax.random.normal(k_g, (N, C, W, H), dtype=jnp.float32)
    weight = jax.random.normal(k_w, (1, C, 1, 1), dtype=jnp.float32) * 0.1

    # normalize_attn=True (softmax) branch.
    c_out, g_out = fwd(l, g, weight, normalize_attn=True)
    jax.block_until_ready((c_out, g_out))
    c_ref, gref = _reference(l, g, weight, normalize_attn=True)
    _check(c_out, c_ref); _check(g_out, gref)

    # normalize_attn=False (sigmoid + adaptive avg-pool) branch.
    c_out2, g_out2 = fwd(l, g, weight, normalize_attn=False)
    jax.block_until_ready((c_out2, g_out2))
    c_ref2, gref2 = _reference(l, g, weight, normalize_attn=False)
    _check(c_out2, c_ref2); _check(g_out2, gref2)

    # Non-lane-aligned spatial size (14x14 -> S=196): ragged lanes handled by
    # Mosaic's masked reductions, no host-side padding.
    lp = jax.random.normal(k_l, (N, C, 14, 14), dtype=jnp.float32)
    gp = jax.random.normal(k_g, (N, C, 14, 14), dtype=jnp.float32)
    for norm in (True, False):
        c_o, g_o = fwd(lp, gp, weight, normalize_attn=norm)
        jax.block_until_ready((c_o, g_o))
        c_r, g_r = _reference(lp, gp, weight, normalize_attn=norm)
        _check(c_o, c_r); _check(g_o, g_r)

    # Ragged batch grid (N=10 -> bn=8, 2 grid steps, final block partially OOB).
    Nb = 10
    lb = jax.random.normal(k_l, (Nb, C, W, H), dtype=jnp.float32)
    gb = jax.random.normal(k_g, (Nb, C, W, H), dtype=jnp.float32)
    c_out4, g_out4 = fwd(lb, gb, weight, normalize_attn=True)
    jax.block_until_ready((c_out4, g_out4))
    c_ref4, gref4 = _reference(lb, gb, weight, normalize_attn=True)
    _check(c_out4, c_ref4); _check(g_out4, gref4)

    print("KERNEL_OK")
</pallas_src>

<mosaic_0001>
module attributes {stable_mosaic.version = 11 : i64} {
  func.func @_linear_attn_kernel(%arg0: i32, %arg1: memref<4x1xf32, #tpu.memory_space<vmem>>, %arg2: memref<2x4x256xf32, #tpu.memory_space<vmem>>, %arg3: memref<2x4x256xf32, #tpu.memory_space<vmem>>, %arg4: memref<2x256xf32, #tpu.memory_space<vmem>>, %arg5: memref<2x4xf32, #tpu.memory_space<vmem>>) attributes {dimension_semantics = [#tpu.dimension_semantics<parallel>], iteration_bounds = array<i64: 1>, scalar_prefetch = 0 : i64, scratch_operands = 0 : i64, tpu.core_type = #tpu.core_type<tc>, window_params = [{pipeline_mode = #tpu.pipeline_mode<synchronous>, transform_indices = @transform_0, window_bounds = array<i64: 4, 1>}, {transform_indices = @transform_1, window_bounds = array<i64: 2, 4, 256>}, {transform_indices = @transform_2, window_bounds = array<i64: 2, 4, 256>}, {transform_indices = @transform_3, window_bounds = array<i64: 2, 256>}, {transform_indices = @transform_4, window_bounds = array<i64: 2, 4>}]} {
    %c0 = arith.constant 0 : index
    %c0_0 = arith.constant 0 : index
    %c0_1 = arith.constant 0 : index
    %0 = vector.load %arg2[%c0, %c0_0, %c0_1] : memref<2x4x256xf32, #tpu.memory_space<vmem>>, vector<2x4x256xf32>
    %c0_2 = arith.constant 0 : index
    %c0_3 = arith.constant 0 : index
    %c0_4 = arith.constant 0 : index
    %1 = vector.load %arg3[%c0_2, %c0_3, %c0_4] : memref<2x4x256xf32, #tpu.memory_space<vmem>>, vector<2x4x256xf32>
    %2 = arith.addf %0, %1 : vector<2x4x256xf32>
    %c0_5 = arith.constant 0 : index
    %c0_6 = arith.constant 0 : index
    %3 = vector.load %arg1[%c0_5, %c0_6] : memref<4x1xf32, #tpu.memory_space<vmem>>, vector<4x1xf32>
    %4 = vector.shape_cast %3 : vector<4x1xf32> to vector<1x4x1xf32>
    %5 = vector.broadcast %4 : vector<1x4x1xf32> to vector<2x4x256xf32>
    %6 = arith.mulf %2, %5 : vector<2x4x256xf32>
    %cst = arith.constant dense<0.000000e+00> : vector<2x256xf32>
    %7 = vector.multi_reduction <add>, %6, %cst [1] : vector<2x4x256xf32> to vector<2x256xf32>
    %c0_7 = arith.constant 0 : index
    %c0_8 = arith.constant 0 : index
    %8 = vector.load %arg4[%c0_7, %c0_8] : memref<2x256xf32, #tpu.memory_space<vmem>>, vector<2x256xf32>
    tpu.vector_store %arg4[%c0_7, %c0_8], %7 {strides = array<i32>} : memref<2x256xf32, #tpu.memory_space<vmem>>, vector<2x256xf32>,
    %cst_9 = arith.constant dense<0xFF800000> : vector<2xf32>
    %9 = vector.multi_reduction <maximumf>, %7, %cst_9 [1] : vector<2x256xf32> to vector<2xf32>
    %10 = vector.shape_cast %9 : vector<2xf32> to vector<2x1xf32>
    %11 = vector.broadcast %10 : vector<2x1xf32> to vector<2x256xf32>
    %12 = arith.subf %7, %11 : vector<2x256xf32>
    %13 = math.exp %12 : vector<2x256xf32>
    %cst_10 = arith.constant dense<0.000000e+00> : vector<2xf32>
    %14 = vector.multi_reduction <add>, %13, %cst_10 [1] : vector<2x256xf32> to vector<2xf32>
    %15 = vector.shape_cast %14 : vector<2xf32> to vector<2x1xf32>
    %16 = vector.shape_cast %13 : vector<2x256xf32> to vector<2x1x256xf32>
    %17 = vector.broadcast %16 : vector<2x1x256xf32> to vector<2x4x256xf32>
    %18 = arith.mulf %17, %0 : vector<2x4x256xf32>
    %cst_11 = arith.constant dense<0.000000e+00> : vector<2x4xf32>
    %19 = vector.multi_reduction <add>, %18, %cst_11 [2] : vector<2x4x256xf32> to vector<2x4xf32>
    %20 = tpu.reciprocal %15 {approx = true} : vector<2x1xf32> -> vector<2x1xf32>
    %21 = arith.mulf %15, %20 : vector<2x1xf32>
    %cst_12 = arith.constant 2.000000e+00 : f32
    %22 = vector.broadcast %cst_12 : f32 to vector<2x1xf32>
    %23 = arith.subf %22, %21 : vector<2x1xf32>
    %24 = arith.mulf %20, %23 : vector<2x1xf32>
    %25 = vector.broadcast %24 : vector<2x1xf32> to vector<2x4xf32>
    %26 = arith.mulf %19, %25 : vector<2x4xf32>
    %c0_13 = arith.constant 0 : index
    %c0_14 = arith.constant 0 : index
    %27 = vector.load %arg5[%c0_13, %c0_14] : memref<2x4xf32, #tpu.memory_space<vmem>>, vector<2x4xf32>
    tpu.vector_store %arg5[%c0_13, %c0_14], %26 {strides = array<i32>} : memref<2x4xf32, #tpu.memory_space<vmem>>, vector<2x4xf32>,
    return
  }
  func.func @transform_0(%arg0: i32) -> (i32, i32) {
    %c0_i32 = arith.constant 0 : i32
    %c0_i32_0 = arith.constant 0 : i32
    %c0_i32_1 = arith.constant 0 : i32
    return %c0_i32, %c0_i32_0 : i32, i32
  }
  func.func @transform_1(%arg0: i32) -> (i32, i32, i32) {
    %c0_i32 = arith.constant 0 : i32
    %c0_i32_0 = arith.constant 0 : i32
    %c0_i32_1 = arith.constant 0 : i32
    return %arg0, %c0_i32, %c0_i32_0 : i32, i32, i32
  }
  func.func @transform_2(%arg0: i32) -> (i32, i32, i32) {
    %c0_i32 = arith.constant 0 : i32
    %c0_i32_0 = arith.constant 0 : i32
    %c0_i32_1 = arith.constant 0 : i32
    return %arg0, %c0_i32, %c0_i32_0 : i32, i32, i32
  }
  func.func @transform_3(%arg0: i32) -> (i32, i32) {
    %c0_i32 = arith.constant 0 : i32
    %c0_i32_0 = arith.constant 0 : i32
    return %arg0, %c0_i32 : i32, i32
  }
  func.func @transform_4(%arg0: i32) -> (i32, i32) {
    %c0_i32 = arith.constant 0 : i32
    %c0_i32_0 = arith.constant 0 : i32
    return %arg0, %c0_i32 : i32, i32
  }
}

</mosaic_0001>

<llo_original>
// kernel: linear_attention_block.1
$region0: #{linear_attention_block.1}
  #allocation0 [shape = 'u32[]', space=smem, size = 0x4, offset = 0x4, fixed_abs, tag = 'smem constant byte address 0x4 - core index']
  #allocation1 [shape = 'u32[144,128]{1,0:T(1,128)}', space=vmem, size = 0x12000, scoped, tag = 'internal scratch']
  %s0 = inlined_call_operand.vmem [shape: f32[4,1], index: 0, kind: input, shape index: {}]
  %s1 = inlined_call_operand.vmem [shape: f32[2,4,256], index: 1, kind: input, shape index: {}]
  %s2 = inlined_call_operand.vmem [shape: f32[2,4,256], index: 2, kind: input, shape index: {}]
  %s3 = inlined_call_operand.vmem [shape: f32[2,256], index: 3, kind: output, shape index: {0}]
  %s4 = inlined_call_operand.hbm [shape: f32[2,4], index: 4, kind: output, shape index: {1}]
  %5 = xla_tuple %s3, %s4
  %s6 = sld [smem:[#allocation0]]
  $region30: #{linear_attention_block.1} parent=0
    _
  %s8 = ssub.s32 1, %s6
  %s9 = scalar_select 0, %s8, %s6
  $region1: #{linear_attention_block.1} parent=0
    #allocation2 [shape = 'u8[1024]{0}', space=vmem, size = 0x400, scoped, tag = 'output window, operand 1, single buffered']
    #allocation3 [shape = 's32[1]{0}', space=sflag, size = 0x4, scoped, tag = 'scoped memory for linear_attention_block.1']
    %10 = vsyncpa [#allocation3], 0
    // Predicated region
    $region2: #{linear_attention_block.1} parent=1 // pred_check
      _
    $region3: #{linear_attention_block.1} parent=1 // pred_check_branch
      %12 = sbr.rel (0) target = $region5
    $region4: #{linear_attention_block.1} parent=1 // pred_region
      _
    $region5: #{linear_attention_block.1} parent=1 // pred_fallthru
      _
    // Predicated region
    $region6: #{linear_attention_block.1} parent=1 // pred_check
      _
    $region7: #{linear_attention_block.1} parent=1 // pred_check_branch
      %14 = sbr.rel (0) target = $region9
    $region8: #{linear_attention_block.1} parent=1 // pred_region
      _
    $region9: #{linear_attention_block.1} parent=1 // pred_fallthru
      _
    // Predicated region
    $region10: #{linear_attention_block.1} parent=1 // pred_check
      _
    $region11: #{linear_attention_block.1} parent=1 // pred_check_branch
      %16 = sbr.rel (0) target = $region13
    $region12: #{linear_attention_block.1} parent=1 // pred_region
      _
    $region13: #{linear_attention_block.1} parent=1 // pred_fallthru
      _
    %v17 = vld [vmem:[%s1] sm:$0xff]
    %v18 = vld [vmem:[%s1 + $0x8] sm:$0xff]
    %v19 = vld [vmem:[%s2] sm:$0xff]
    %v20 = vld [vmem:[%s2 + $0x8] sm:$0xff]
    %v21 = vadd.f32 %v17, %v19
    %v22 = vadd.f32 %v18, %v20
    %v23 = vld [vmem:[%s0] sm:$0xf]
    %25 = vset.pattern.permute.xlu0 0
    %26 = vperm.xlu0 %25, %v23
    %v27 = vpop.permute.xlu0 %26
    %v29 = vunpack.c.l.s4 839922192
    %v30 = vunpack.c.0.s8 %v29
    %v31 = vlaneseq
    %v32 = vshrl.u32 %v31, 7
    %v33 = vsub.s32 %v30, %v32
    %v34 = vrot.slane %v27, %v33
    %v36 = vmul.f32 %v21, %v34
    %v37 = vmul.f32 %v22, %v34
    %v40 = vcombine.high %v36, %v36
    %v41 = vcombine.high %v37, %v37
    %vm44 = vcmask 1043456
    %v45 = vsel %vm44, %v36, 0.0
    %v46 = vrot.slane %v45, 4
    %v47 = vadd.f32 %v45, %v46
    %v48 = vrot.slane %v47, 2
    %v49 = vadd.f32 %v47, %v48
    %v50 = vrot.slane %v49, 1
    %v51 = vadd.f32 %v49, %v50
    %v52 = vsel %vm44, %v40, 0.0
    %v53 = vrot.slane %v52, 4
    %v54 = vadd.f32 %v52, %v53
    %v55 = vrot.slane %v54, 2
    %v56 = vadd.f32 %v54, %v55
    %v57 = vrot.slane %v56, 1
    %v58 = vadd.f32 %v56, %v57
    %v59 = vsel %vm44, %v37, 0.0
    %v60 = vrot.slane %v59, 4
    %v61 = vadd.f32 %v59, %v60
    %v62 = vrot.slane %v61, 2
    %v63 = vadd.f32 %v61, %v62
    %v64 = vrot.slane %v63, 1
    %v65 = vadd.f32 %v63, %v64
    %v66 = vsel %vm44, %v41, 0.0
    %v67 = vrot.slane %v66, 4
    %v68 = vadd.f32 %v66, %v67
    %v69 = vrot.slane %v68, 2
    %v70 = vadd.f32 %v68, %v69
    %v71 = vrot.slane %v70, 1
    %v72 = vadd.f32 %v70, %v71
    %v77 = vcombine.low %v51, %v58
    %v79 = vunpack.c.l.s4 1983009808
    %v80 = vunpack.c.0.s8 %v79
    %v81 = vlaneseq
    %v82 = vshrl.u32 %v81, 7
    %v83 = vsub.s32 %v80, %v82
    %v84 = vrot.slane %v77, %v83
    %v85 = vcombine.low %v65, %v72
    %v87 = vunpack.c.l.s4 1983009808
    %v88 = vunpack.c.0.s8 %v87
    %v89 = vlaneseq
    %v90 = vshrl.u32 %v89, 7
    %v91 = vsub.s32 %v88, %v90
    %v92 = vrot.slane %v85, %v91
    %vm93 = vcmask 1044484
    %v94 = vsel %vm93, %v84, %v84
    %vm95 = vcmask 1046534
    %v96 = vsel %vm95, %v84, %v94
    %v97 = vrot.slane %v92, 7
    %vm98 = vcmask 1041409
    %v99 = vsel %vm98, %v97, %v96
    %vm100 = vcmask 1043459
    %v101 = vsel %vm100, %v97, %v99
    %vm102 = vcmask 1045509
    %v103 = vsel %vm102, %v97, %v101
    %vm104 = vcmask 1047559
    %v105 = vsel %vm104, %v97, %v103
    %107 = vst [vmem:[%s3] sm:$0xf] %v105
    %v108 = vsel %vm98, %v65, %v51
    %v109 = vsel %vm98, %v72, %v58
    %vm112 = vcmask 1041408
    %v113 = vsel %vm112, %v108, -inf
    %v114 = vsel %vm112, %v109, -inf
    %v115 = vmax.f32 %v113, %v114
    %116 = vmax.xlane.f32.xlu0 %v115
    %v117 = vpop.xlane.xlu0 %116
    %v119 = vrot.slane %v117, 1
    %v122 = vsub.f32 %v51, %v117
    %v123 = vsub.f32 %v58, %v117
    %v124 = vsub.f32 %v65, %v119
    %v125 = vsub.f32 %v72, %v119
    %v126 = vmul.f32 %v122, 1.442695
    %v127 = vpow.pop %v126
    %v128 = vmul.f32 %v123, 1.442695
    %v129 = vpow.pop %v128
    %v130 = vmul.f32 %v124, 1.442695
    %v131 = vpow.pop %v130
    %v132 = vmul.f32 %v125, 1.442695
    %v133 = vpow.pop %v132
    %v138 = vrot.slane %v131, 7
    %v139 = vsel %vm98, %v138, %v127
    %v140 = vrot.slane %v133, 7
    %v141 = vsel %vm98, %v140, %v129
    %v144 = vsel %vm112, %v139, 0.0
    %v145 = vsel %vm112, %v141, 0.0
    %v146 = vadd.f32 %v144, %v145
    %147 = vadd.xlane.f32.xlu0 %v146
    %v148 = vpop.xlane.xlu0 %147
    %v149 = vlaneseq
    %v150 = vshrl.u32 %v149, 7
    %v151 = vsub.s32 0, %v150
    %v152 = vrot.slane %v127, %v151
    %v153 = vlaneseq
    %v154 = vshrl.u32 %v153, 7
    %v155 = vsub.s32 0, %v154
    %v156 = vrot.slane %v129, %v155
    %v157 = vlaneseq
    %v158 = vshrl.u32 %v157, 7
    %v159 = vsub.s32 0, %v158
    %v160 = vrot.slane %v131, %v159
    %v161 = vlaneseq
    %v162 = vshrl.u32 %v161, 7
    %v163 = vsub.s32 0, %v162
    %v164 = vrot.slane %v133, %v163
    %v167 = vcombine.high %v17, %v17
    %v168 = vcombine.high %v18, %v18
    %v171 = vmul.f32 %v152, %v17
    %v172 = vmul.f32 %v156, %v167
    %v173 = vmul.f32 %v160, %v18
    %v174 = vmul.f32 %v164, %v168
    %v175 = vsel %vm44, %v171, 0.0
    %v176 = vsel %vm44, %v172, 0.0
    %v177 = vadd.f32 %v175, %v176
    %178 = vadd.xlane.f32.xlu0 %v177
    %v179 = vpop.xlane.xlu0 %178
    %v180 = vsel %vm44, %v173, 0.0
    %v181 = vsel %vm44, %v174, 0.0
    %v182 = vadd.f32 %v180, %v181
    %183 = vadd.xlane.f32.xlu0 %v182
    %v184 = vpop.xlane.xlu0 %183
    %v185 = vrcp.pop %v148
    %v186 = vmul.f32 %v148, %v185
    %v187 = vsub.f32 2.0, %v186
    %v188 = vmul.f32 %v185, %v187
    %v190 = vlaneseq
    %v191 = vshrl.u32 %v190, 7
    %v192 = vsub.s32 0, %v191
    %v193 = vrot.slane %v188, %v192
    %v194 = vlaneseq
    %v195 = vshrl.u32 %v194, 7
    %v196 = vsub.s32 1, %v195
    %v197 = vrot.slane %v188, %v196
    %v200 = vmul.f32 %v179, %v193
    %v201 = vmul.f32 %v184, %v197
    %204 = vset.pattern.permute.xlu0 0
    %205 = vperm.xlu0 %204, %v200
    %v206 = vpop.permute.xlu0 %205
    %207 = vset.pattern.permute.xlu0 0
    %208 = vperm.xlu0 %207, %v201
    %v209 = vpop.permute.xlu0 %208
    %v210 = vlaneseq
    %v211 = vand.u32 %v210, 127
    %v212 = vlaneseq
    %v213 = vshrl.u32 %v212, 7
    %v214 = vsub.s32 %v211, %v213
    %v215 = vrot.slane %v206, %v214
    %v216 = vlaneseq
    %v217 = vshrl.u32 %v216, 7
    %v218 = vsub.s32 %v211, %v217
    %v219 = vrot.slane %v209, %v218
    %v220 = vsel %vm98, %v219, %v215
    %vm222 = vcmask 25600
    %223 = vst.msk [vmem:[#allocation2] sm:$0x3] %vm222, %v220
    // Predicated region
    $region14: #{linear_attention_block.1} parent=1 // pred_check
      _
    $region15: #{linear_attention_block.1} parent=1 // pred_check_branch
      %225 = sbr.rel (0) target = $region17
    $region16: #{linear_attention_block.1} parent=1 // pred_region
      _
    $region17: #{linear_attention_block.1} parent=1 // pred_fallthru
      _
    // Predicated region
    $region18: #{linear_attention_block.1} parent=1 // pred_check
      _
    $region19: #{linear_attention_block.1} parent=1 // pred_check_branch
      %227 = sbr.rel (0) target = $region21
    $region20: #{linear_attention_block.1} parent=1 // pred_region
      %s229 = ssub.s32 32, 32
      %230 = vsyncadd [#allocation3], %s229
      %s232 = sshll.u32 [#allocation2], 4
      %s233 = int_to_ptr.vmem [resolvable:$true] %s232
      %235 = dma.vmem_to_hbm [thread:$0]  %s233, 32, %s4, [#allocation3]
    $region21: #{linear_attention_block.1} parent=1 // pred_fallthru
      _
    // Predicated region
    $region22: #{linear_attention_block.1} parent=1 // pred_check
      _
    $region23: #{linear_attention_block.1} parent=1 // pred_check_branch
      %237 = sbr.rel (0) target = $region25
    $region24: #{linear_attention_block.1} parent=1 // pred_region
      _
    $region25: #{linear_attention_block.1} parent=1 // pred_fallthru
      _
    // Predicated region
    $region26: #{linear_attention_block.1} parent=1 // pred_check
      _
    $region27: #{linear_attention_block.1} parent=1 // pred_check_branch
      %239 = sbr.rel (0) target = $region29
    $region28: #{linear_attention_block.1} parent=1 // pred_region
      %240 = dma.done [#allocation3], 32
    $region29: #{linear_attention_block.1} parent=1 // pred_fallthru
      _
    %241 = vsyncpa [#allocation3], 1

</llo_original>
